<compile_context>
chip_gen: v7x
topology: tpu7x:2x2x1
jax: 0.10.0
libtpu: 0.0.40
codegen_flags: <defaults>
</compile_context>

<pallas_src>
import functools

import jax
import jax.numpy as jnp
from jax import lax
from jax.experimental import pallas as pl
from jax.experimental.pallas import tpu as pltpu

ACT_DTYPE = jnp.bfloat16  # storage dtype for intermediate activations


# ---------------------------------------------------------------------------
# GEMM kernels: conv-as-matmul with fused BN bias, optional ReLU and optional
# fused residual add (Bottleneck epilogue).  bf16 MXU inputs, f32 accumulation.
# ---------------------------------------------------------------------------

def _gemm_bias_act_kernel(a_ref, b_ref, bias_ref, o_ref, *, relu):
    acc = jnp.dot(a_ref[...], b_ref[...], preferred_element_type=jnp.float32)
    acc = acc + bias_ref[...]
    if relu:
        acc = jnp.maximum(acc, 0.0)
    o_ref[...] = acc.astype(o_ref.dtype)


def _gemm_bias_res_relu_kernel(a_ref, b_ref, bias_ref, res_ref, o_ref):
    acc = jnp.dot(a_ref[...], b_ref[...], preferred_element_type=jnp.float32)
    acc = acc + bias_ref[...] + res_ref[...].astype(jnp.float32)
    acc = jnp.maximum(acc, 0.0)
    o_ref[...] = acc.astype(o_ref.dtype)


def matmul_bias_act(a, bmat, bias, *, relu, residual=None, out_dtype=ACT_DTYPE):
    """(M, K) @ (K, N) + bias [+ residual], optional ReLU, tiled over M."""
    M, K = a.shape
    K2, N = bmat.shape
    assert K == K2
    a = a.astype(jnp.bfloat16)
    bmat = bmat.astype(jnp.bfloat16)
    bias2 = bias.reshape(1, N).astype(jnp.float32)

    # Single full block for small M (overhead-bound regime), 512-row tiles
    # otherwise; ragged last block is masked by Pallas (no host-side padding).
    tm = M if M <= 512 else 512
    grid = (pl.cdiv(M, tm),)

    in_specs = [
        pl.BlockSpec((tm, K), lambda i: (i, 0)),
        pl.BlockSpec((K, N), lambda i: (0, 0)),
        pl.BlockSpec((1, N), lambda i: (0, 0)),
    ]
    args = [a, bmat, bias2]
    if residual is not None:
        assert relu, "fused residual path always applies the final ReLU"
        in_specs.append(pl.BlockSpec((tm, N), lambda i: (i, 0)))
        args.append(residual.astype(jnp.bfloat16))
        kernel = _gemm_bias_res_relu_kernel
    else:
        kernel = functools.partial(_gemm_bias_act_kernel, relu=relu)

    return pl.pallas_call(
        kernel,
        out_shape=jax.ShapeDtypeStruct((M, N), out_dtype),
        grid_spec=pl.GridSpec(
            grid=grid,
            in_specs=in_specs,
            out_specs=pl.BlockSpec((tm, N), lambda i: (i, 0)),
        ),
        compiler_params=pltpu.CompilerParams(dimension_semantics=("parallel",)),
    )(*args)


# ---------------------------------------------------------------------------
# Convolutions (NHWC).  1x1: direct GEMM.  3x3: host im2col (bf16) + GEMM.
# BatchNorm is folded into the conv weight / bias; ReLU (and the residual add
# for Bottleneck conv3) is fused into the GEMM epilogue.
# ---------------------------------------------------------------------------

def conv1x1_bn_act(x, wmat, bias, *, relu, residual=None):
    N, H, W, Cin = x.shape
    Cout = wmat.shape[1]
    a = x.reshape(N * H * W, Cin)
    res = None if residual is None else residual.reshape(N * H * W, Cout)
    out = matmul_bias_act(a, wmat, bias, relu=relu, residual=res)
    return out.reshape(N, H, W, Cout)


def conv3x3_bn_act(x, wconv, bias, *, stride, relu):
    # TODO(synk): fold the 3x3 tap loop into the GEMM grid (in-kernel tap
    #             accumulation) to avoid this 9x im2col materialization at
    #             full CLIP resolutions.  Done in bf16 to halve the traffic.
    N, H, W, Cin = x.shape
    KH, KW, _, Cout = wconv.shape
    pad = 1
    Ho = (H + 2 * pad - KH) // stride + 1
    Wo = (W + 2 * pad - KW) // stride + 1
    xp = jnp.pad(x.astype(jnp.bfloat16),
                 ((0, 0), (pad, pad), (pad, pad), (0, 0)))
    cols = [xp[:, i:i + stride * Ho:stride, j:j + stride * Wo:stride, :]
            for i in range(KH) for j in range(KW)]
    a = jnp.stack(cols, axis=3).reshape(N * Ho * Wo, KH * KW * Cin)
    out = matmul_bias_act(a, wconv.reshape(KH * KW * Cin, Cout), bias, relu=relu)
    return out.reshape(N, Ho, Wo, Cout)


# ---------------------------------------------------------------------------
# 2x2 average pool (stem avgpool and the Bottleneck anti-aliased stride).
# Non-overlapping windows -> four quarter views, averaged in a tiled kernel.
# ---------------------------------------------------------------------------

def _avg4_kernel(a_ref, b_ref, c_ref, d_ref, o_ref):
    s = (a_ref[...].astype(jnp.float32) + b_ref[...].astype(jnp.float32) +
         c_ref[...].astype(jnp.float32) + d_ref[...].astype(jnp.float32))
    o_ref[...] = (0.25 * s).astype(o_ref.dtype)


def avg_pool_2x2(x):
    N, H, W, C = x.shape
    assert H % 2 == 0 and W % 2 == 0
    Ho, Wo = H // 2, W // 2
    M = N * Ho * Wo
    q00 = x[:, 0::2, 0::2, :].reshape(M, C)
    q01 = x[:, 0::2, 1::2, :].reshape(M, C)
    q10 = x[:, 1::2, 0::2, :].reshape(M, C)
    q11 = x[:, 1::2, 1::2, :].reshape(M, C)
    tm = M if M <= 1024 else 1024
    out = pl.pallas_call(
        _avg4_kernel,
        out_shape=jax.ShapeDtypeStruct((M, C), ACT_DTYPE),
        grid_spec=pl.GridSpec(
            grid=(pl.cdiv(M, tm),),
            in_specs=[pl.BlockSpec((tm, C), lambda i: (i, 0))] * 4,
            out_specs=pl.BlockSpec((tm, C), lambda i: (i, 0)),
        ),
        compiler_params=pltpu.CompilerParams(dimension_semantics=("parallel",)),
    )(q00, q01, q10, q11)
    return out.reshape(N, Ho, Wo, C)


# ---------------------------------------------------------------------------
# Attention pool pieces
# ---------------------------------------------------------------------------

def _token_mean_kernel(x_ref, o_ref):
    # x block: (L, N, tc) -> mean over the token axis (a leading dim).
    o_ref[...] = jnp.mean(x_ref[...].astype(jnp.float32), axis=0)


def token_mean(tokens_lnc):
    """(L, N, C) -> (N, C) mean over tokens, tiled over the lane (C) axis."""
    L, N, C = tokens_lnc.shape
    tc = C if C <= 1024 else 1024
    return pl.pallas_call(
        _token_mean_kernel,
        out_shape=jax.ShapeDtypeStruct((N, C), jnp.float32),
        grid_spec=pl.GridSpec(
            grid=(pl.cdiv(C, tc),),
            in_specs=[pl.BlockSpec((L, N, tc), lambda j: (0, 0, j))],
            out_specs=pl.BlockSpec((N, tc), lambda j: (0, j)),
        ),
        compiler_params=pltpu.CompilerParams(dimension_semantics=("parallel",)),
    )(tokens_lnc)


def _mha_pool_kernel(q_ref, k_ref, v_ref, o_ref, *, scale):
    q = q_ref[0].astype(jnp.float32)          # (heads, 1, hd)
    k = k_ref[0].astype(jnp.float32)          # (heads, L, hd)
    v = v_ref[0].astype(jnp.float32)          # (heads, L, hd)
    s = jnp.einsum("hqd,hkd->hqk", q, k,
                   preferred_element_type=jnp.float32) * scale
    m = jnp.max(s, axis=-1, keepdims=True)
    e = jnp.exp(s - m)
    denom = jnp.sum(e, axis=-1, keepdims=True)
    p = e * pl.reciprocal(denom, approx=True)
    o = jnp.einsum("hqk,hkd->hqd", p, v, preferred_element_type=jnp.float32)
    o_ref[...] = o.reshape(o_ref.shape)


def mha_pool(qh, kh, vh):
    """Single-query multi-head attention: q (N,H,1,d), k/v (N,H,L,d)."""
    N, H, Lq, d = qh.shape
    L = kh.shape[2]
    scale = 1.0 / float(d) ** 0.5
    return pl.pallas_call(
        functools.partial(_mha_pool_kernel, scale=scale),
        out_shape=jax.ShapeDtypeStruct((N, H, Lq, d), jnp.float32),
        grid_spec=pl.GridSpec(
            grid=(N,),
            in_specs=[
                pl.BlockSpec((1, H, Lq, d), lambda n: (n, 0, 0, 0)),
                pl.BlockSpec((1, H, L, d), lambda n: (n, 0, 0, 0)),
                pl.BlockSpec((1, H, L, d), lambda n: (n, 0, 0, 0)),
            ],
            out_specs=pl.BlockSpec((1, H, Lq, d), lambda n: (n, 0, 0, 0)),
        ),
        compiler_params=pltpu.CompilerParams(dimension_semantics=("parallel",)),
    )(qh, kh, vh)


def attention_pool(x, ap):
    """CLIP AttentionPool2d on NHWC features -> (N, output_dim)."""
    N, H, W, C = x.shape
    L0 = H * W
    nh = ap["heads"]
    hd = C // nh
    feat = x.reshape(N, L0, C).astype(jnp.float32)
    mean_tok = token_mean(jnp.transpose(feat, (1, 0, 2)))            # (N, C)
    # Token concat + positional embedding: tiny host-side glue.
    tokens = jnp.concatenate([mean_tok[:, None, :], feat], axis=1)   # (N, L, C)
    tokens = tokens + ap["pos_emb"][None, :, :]
    L = L0 + 1

    q = matmul_bias_act(tokens[:, 0, :], ap["q_w"], ap["q_b"],
                        relu=False, out_dtype=jnp.float32)           # (N, C)
    kv = tokens.reshape(N * L, C)
    k = matmul_bias_act(kv, ap["k_w"], ap["k_b"], relu=False,
                        out_dtype=jnp.float32)
    v = matmul_bias_act(kv, ap["v_w"], ap["v_b"], relu=False,
                        out_dtype=jnp.float32)

    qh = q.reshape(N, 1, nh, hd).transpose(0, 2, 1, 3)               # (N,nh,1,hd)
    khh = k.reshape(N, L, nh, hd).transpose(0, 2, 1, 3)              # (N,nh,L,hd)
    vhh = v.reshape(N, L, nh, hd).transpose(0, 2, 1, 3)
    oh = mha_pool(qh, khh, vhh)                                      # (N,nh,1,hd)
    o = oh.transpose(0, 2, 1, 3).reshape(N, C)
    return matmul_bias_act(o, ap["c_w"], ap["c_b"], relu=False,
                           out_dtype=jnp.float32)                    # (N, out)


# ---------------------------------------------------------------------------
# L2 normalization of the global embedding (ImageEncoder_CLIP, norm=True)
# ---------------------------------------------------------------------------

def _l2norm_kernel(x_ref, o_ref):
    x = x_ref[...].astype(jnp.float32)
    ss = jnp.sum(x * x, axis=-1, keepdims=True)
    o_ref[...] = x * lax.rsqrt(ss)


def l2_normalize(x):
    N, D = x.shape
    tn = N if N <= 512 else 512
    return pl.pallas_call(
        _l2norm_kernel,
        out_shape=jax.ShapeDtypeStruct((N, D), jnp.float32),
        grid_spec=pl.GridSpec(
            grid=(pl.cdiv(N, tn),),
            in_specs=[pl.BlockSpec((tn, D), lambda i: (i, 0))],
            out_specs=pl.BlockSpec((tn, D), lambda i: (i, 0)),
        ),
        compiler_params=pltpu.CompilerParams(dimension_semantics=("parallel",)),
    )(x.astype(jnp.float32))


# ---------------------------------------------------------------------------
# Parameter construction (deterministic, BN folded into conv weight/bias)
# ---------------------------------------------------------------------------

def _fold_bn(w, key, cout):
    k1, k2, k3 = jax.random.split(key, 3)
    gamma = 1.0 + 0.1 * jax.random.normal(k1, (cout,), jnp.float32)
    beta = 0.1 * jax.random.normal(k2, (cout,), jnp.float32)
    mean = 0.1 * jax.random.normal(k3, (cout,), jnp.float32)
    var = jnp.ones((cout,), jnp.float32)
    scale = gamma / jnp.sqrt(var + 1e-5)
    return w * scale, beta - mean * scale


def make_conv3x3_bn(key, cin, cout):
    kw, kb = jax.random.split(key)
    w = jax.random.normal(kw, (3, 3, cin, cout), jnp.float32) / jnp.sqrt(9.0 * cin)
    return _fold_bn(w, kb, cout)


def make_conv1x1_bn(key, cin, cout):
    kw, kb = jax.random.split(key)
    w = jax.random.normal(kw, (cin, cout), jnp.float32) / jnp.sqrt(1.0 * cin)
    return _fold_bn(w, kb, cout)


def make_linear(key, cin, cout):
    kw, kb = jax.random.split(key)
    w = jax.random.normal(kw, (cin, cout), jnp.float32) / jnp.sqrt(1.0 * cin)
    b = 0.02 * jax.random.normal(kb, (cout,), jnp.float32)
    return w, b


def init_params(key, *, layers=(2, 1, 1, 1), width=16, heads=4,
                output_dim=128, input_resolution=32):
    keys = iter(jax.random.split(key, 128))
    p = {}
    p["stem1"] = make_conv3x3_bn(next(keys), 3, width // 2)
    p["stem2"] = make_conv3x3_bn(next(keys), width // 2, width // 2)
    p["stem3"] = make_conv3x3_bn(next(keys), width // 2, width)

    inplanes = width
    stages = []
    for li, nblocks in enumerate(layers):
        planes = width * (2 ** li)
        first_stride = 1 if li == 0 else 2
        blocks = []
        for bi in range(nblocks):
            s = first_stride if bi == 0 else 1
            blk = {"stride": s}
            blk["conv1_w"], blk["conv1_b"] = make_conv1x1_bn(next(keys), inplanes, planes)
            blk["conv2_w"], blk["conv2_b"] = make_conv3x3_bn(next(keys), planes, planes)
            blk["conv3_w"], blk["conv3_b"] = make_conv1x1_bn(next(keys), planes, planes * 4)
            if s > 1 or inplanes != planes * 4:
                blk["down_w"], blk["down_b"] = make_conv1x1_bn(next(keys), inplanes, planes * 4)
            inplanes = planes * 4
            blocks.append(blk)
        stages.append(blocks)
    p["layers"] = stages

    embed_dim = width * 32
    spacial = input_resolution // 32
    ap = {"heads": heads}
    ap["pos_emb"] = (jax.random.normal(next(keys), (spacial * spacial + 1, embed_dim),
                                       jnp.float32) / jnp.sqrt(1.0 * embed_dim))
    ap["q_w"], ap["q_b"] = make_linear(next(keys), embed_dim, embed_dim)
    ap["k_w"], ap["k_b"] = make_linear(next(keys), embed_dim, embed_dim)
    ap["v_w"], ap["v_b"] = make_linear(next(keys), embed_dim, embed_dim)
    ap["c_w"], ap["c_b"] = make_linear(next(keys), embed_dim, output_dim)
    p["attnpool"] = ap
    p["output_dim"] = output_dim
    return p


# ---------------------------------------------------------------------------
# Forward pass (mirrors ModifiedResNet.forward + ImageEncoder_CLIP.forward)
# ---------------------------------------------------------------------------

def bottleneck_block(x, blk):
    stride = blk["stride"]
    out = conv1x1_bn_act(x, blk["conv1_w"], blk["conv1_b"], relu=True)
    out = conv3x3_bn_act(out, blk["conv2_w"], blk["conv2_b"], stride=1, relu=True)
    if stride > 1:
        out = avg_pool_2x2(out)                      # CLIP's anti-aliased stride
    if "down_w" in blk:
        idn = avg_pool_2x2(x) if stride > 1 else x
        idn = conv1x1_bn_act(idn, blk["down_w"], blk["down_b"], relu=False)
    else:
        idn = x
    # conv3 + bn3 with the residual add and final ReLU fused into the epilogue.
    return conv1x1_bn_act(out, blk["conv3_w"], blk["conv3_b"],
                          relu=True, residual=idn)


def modified_resnet_forward(params, x_nchw):
    # One NCHW -> NHWC transpose at the boundary; channels-last everywhere else.
    x = jnp.transpose(x_nchw.astype(jnp.float32), (0, 2, 3, 1))
    w, b = params["stem1"]
    x = conv3x3_bn_act(x, w, b, stride=2, relu=True)
    w, b = params["stem2"]
    x = conv3x3_bn_act(x, w, b, stride=1, relu=True)
    w, b = params["stem3"]
    x = conv3x3_bn_act(x, w, b, stride=1, relu=True)
    x = avg_pool_2x2(x)
    for blocks in params["layers"]:
        for blk in blocks:
            x = bottleneck_block(x, blk)
    return attention_pool(x, params["attnpool"])


def image_encoder_clip_forward(params, x_nchw, *, norm=True):
    global_emb = modified_resnet_forward(params, x_nchw)
    if norm:
        global_emb = l2_normalize(global_emb)
    return global_emb


if __name__ == "__main__":
    key = jax.random.PRNGKey(0)
    pkey, xkey = jax.random.split(key)
    params = init_params(pkey, layers=(2, 1, 1, 1), width=16, heads=4,
                         output_dim=128, input_resolution=32)
    # Small CLIP-ResNet-compatible input: batch=2, 3 channels, 32x32.
    x = jax.random.normal(xkey, (2, 3, 32, 32), jnp.float32)
    emb = image_encoder_clip_forward(params, x, norm=True)
    jax.block_until_ready(emb)
    assert emb.shape == (2, params["output_dim"])
    assert emb.dtype == jnp.float32
    print("KERNEL_OK")
</pallas_src>

<mosaic_0001>
module attributes {stable_mosaic.version = 11 : i64} {
  func.func @_gemm_bias_act_kernel(%arg0: i32, %arg1: memref<512x27xbf16, #tpu.memory_space<vmem>>, %arg2: memref<27x8xbf16, #tpu.memory_space<vmem>>, %arg3: memref<1x8xf32, #tpu.memory_space<vmem>>, %arg4: memref<512x8xbf16, #tpu.memory_space<vmem>>) attributes {dimension_semantics = [#tpu.dimension_semantics<parallel>], iteration_bounds = array<i64: 1>, scalar_prefetch = 0 : i64, scratch_operands = 0 : i64, tpu.core_type = #tpu.core_type<tc>, window_params = [{transform_indices = @transform_0, window_bounds = array<i64: 512, 27>}, {pipeline_mode = #tpu.pipeline_mode<synchronous>, transform_indices = @transform_1, window_bounds = array<i64: 27, 8>}, {pipeline_mode = #tpu.pipeline_mode<synchronous>, transform_indices = @transform_2, window_bounds = array<i64: 1, 8>}, {transform_indices = @transform_3, window_bounds = array<i64: 512, 8>}]} {
    %c0 = arith.constant 0 : index
    %c0_0 = arith.constant 0 : index
    %0 = vector.load %arg1[%c0, %c0_0] : memref<512x27xbf16, #tpu.memory_space<vmem>>, vector<512x27xbf16>
    %c0_1 = arith.constant 0 : index
    %c0_2 = arith.constant 0 : index
    %1 = vector.load %arg2[%c0_1, %c0_2] : memref<27x8xbf16, #tpu.memory_space<vmem>>, vector<27x8xbf16>
    %cst = arith.constant dense<0.000000e+00> : vector<512x8xf32>
    %2 = tpu.matmul %0, %1, %cst {dimension_numbers = #tpu.dot_dimension_numbers<[1], [0], [0], [1], [0, 0, 1, 1], [], []>} : vector<512x27xbf16>, vector<27x8xbf16>, vector<512x8xf32> -> vector<512x8xf32>
    %c0_3 = arith.constant 0 : index
    %c0_4 = arith.constant 0 : index
    %3 = vector.load %arg3[%c0_3, %c0_4] : memref<1x8xf32, #tpu.memory_space<vmem>>, vector<1x8xf32>
    %4 = vector.broadcast %3 : vector<1x8xf32> to vector<512x8xf32>
    %5 = arith.addf %2, %4 : vector<512x8xf32>
    %cst_5 = arith.constant 0.000000e+00 : f32
    %6 = vector.broadcast %cst_5 : f32 to vector<512x8xf32>
    %7 = arith.maximumf %5, %6 : vector<512x8xf32>
    %8 = arith.truncf %7 : vector<512x8xf32> to vector<512x8xbf16>
    %c0_6 = arith.constant 0 : index
    %c0_7 = arith.constant 0 : index
    %9 = vector.load %arg4[%c0_6, %c0_7] : memref<512x8xbf16, #tpu.memory_space<vmem>>, vector<512x8xbf16>
    tpu.vector_store %arg4[%c0_6, %c0_7], %8 {strides = array<i32>} : memref<512x8xbf16, #tpu.memory_space<vmem>>, vector<512x8xbf16>,
    return
  }
  func.func @transform_0(%arg0: i32) -> (i32, i32) {
    %c0_i32 = arith.constant 0 : i32
    %c0_i32_0 = arith.constant 0 : i32
    return %arg0, %c0_i32 : i32, i32
  }
  func.func @transform_1(%arg0: i32) -> (i32, i32) {
    %c0_i32 = arith.constant 0 : i32
    %c0_i32_0 = arith.constant 0 : i32
    %c0_i32_1 = arith.constant 0 : i32
    return %c0_i32, %c0_i32_0 : i32, i32
  }
  func.func @transform_2(%arg0: i32) -> (i32, i32) {
    %c0_i32 = arith.constant 0 : i32
    %c0_i32_0 = arith.constant 0 : i32
    %c0_i32_1 = arith.constant 0 : i32
    return %c0_i32, %c0_i32_0 : i32, i32
  }
  func.func @transform_3(%arg0: i32) -> (i32, i32) {
    %c0_i32 = arith.constant 0 : i32
    %c0_i32_0 = arith.constant 0 : i32
    return %arg0, %c0_i32 : i32, i32
  }
}

</mosaic_0001>

<llo_original>
// kernel: tpu_custom_call.1
$region0: #{tpu_custom_call.1}
  #allocation0 [shape = 'u32[]', space=smem, size = 0x4, offset = 0x4, fixed_abs, tag = 'smem constant byte address 0x4 - core index']
  #allocation1 [shape = 'u32[144,128]{1,0:T(1,128)}', space=vmem, size = 0x12000, scoped, tag = 'internal scratch']
  %s0 = inlined_call_operand.vmem [shape: bf16[512,27], index: 0, kind: input, shape index: {}]
  %s1 = inlined_call_operand.vmem [shape: bf16[27,8], index: 1, kind: input, shape index: {}]
  %s2 = inlined_call_operand.vmem [shape: f32[1,8], index: 2, kind: input, shape index: {}]
  %s3 = inlined_call_operand.vmem [shape: bf16[512,8], index: 3, kind: output, shape index: {}]
  %s4 = sld [smem:[#allocation0]]
  $region22: #{tpu_custom_call.1} parent=0
    _
  %s6 = ssub.s32 1, %s4
  %s7 = scalar_select 0, %s6, %s4
  // Predicated region
  $region2: #{tpu_custom_call.1} parent=0 // pred_check
    _
  $region3: #{tpu_custom_call.1} parent=0 // pred_check_branch
    %9 = sbr.rel (0) target = $region5
  $region4: #{tpu_custom_call.1} parent=0 // pred_region
    _
  $region5: #{tpu_custom_call.1} parent=0 // pred_fallthru
    _
  // Predicated region
  $region6: #{tpu_custom_call.1} parent=0 // pred_check
    _
  $region7: #{tpu_custom_call.1} parent=0 // pred_check_branch
    %11 = sbr.rel (0) target = $region9
  $region8: #{tpu_custom_call.1} parent=0 // pred_region
    _
  $region9: #{tpu_custom_call.1} parent=0 // pred_fallthru
    _
  // Predicated region
  $region10: #{tpu_custom_call.1} parent=0 // pred_check
    _
  $region11: #{tpu_custom_call.1} parent=0 // pred_check_branch
    %13 = sbr.rel (0) target = $region13
  $region12: #{tpu_custom_call.1} parent=0 // pred_region
    _
  $region13: #{tpu_custom_call.1} parent=0 // pred_fallthru
    _
  %v15 = vld [vmem:[%s0] sm:$0xf]
  %v16 = vld [vmem:[%s0 + $0x4] sm:$0xf]
  %v17 = vld [vmem:[%s0 + $0x8] sm:$0xf]
  %v18 = vld [vmem:[%s0 + $0xc] sm:$0xf]
  %v19 = vld [vmem:[%s0 + $0x10] sm:$0xf]
  %v20 = vld [vmem:[%s0 + $0x14] sm:$0xf]
  %v21 = vld [vmem:[%s0 + $0x18] sm:$0xf]
  %v22 = vld [vmem:[%s0 + $0x1c] sm:$0xf]
  %v23 = vld [vmem:[%s0 + $0x20] sm:$0xf]
  %v24 = vld [vmem:[%s0 + $0x24] sm:$0xf]
  %v25 = vld [vmem:[%s0 + $0x28] sm:$0xf]
  %v26 = vld [vmem:[%s0 + $0x2c] sm:$0xf]
  %v27 = vld [vmem:[%s0 + $0x30] sm:$0xf]
  %v28 = vld [vmem:[%s0 + $0x34] sm:$0xf]
  %v29 = vld [vmem:[%s0 + $0x38] sm:$0xf]
  %v30 = vld [vmem:[%s0 + $0x3c] sm:$0xf]
  %v31 = vld [vmem:[%s0 + $0x40] sm:$0xf]
  %v32 = vld [vmem:[%s0 + $0x44] sm:$0xf]
  %v33 = vld [vmem:[%s0 + $0x48] sm:$0xf]
  %v34 = vld [vmem:[%s0 + $0x4c] sm:$0xf]
  %v35 = vld [vmem:[%s0 + $0x50] sm:$0xf]
  %v36 = vld [vmem:[%s0 + $0x54] sm:$0xf]
  %v37 = vld [vmem:[%s0 + $0x58] sm:$0xf]
  %v38 = vld [vmem:[%s0 + $0x5c] sm:$0xf]
  %v39 = vld [vmem:[%s0 + $0x60] sm:$0xf]
  %v40 = vld [vmem:[%s0 + $0x64] sm:$0xf]
  %v41 = vld [vmem:[%s0 + $0x68] sm:$0xf]
  %v42 = vld [vmem:[%s0 + $0x6c] sm:$0xf]
  %v43 = vld [vmem:[%s0 + $0x70] sm:$0xf]
  %v44 = vld [vmem:[%s0 + $0x74] sm:$0xf]
  %v45 = vld [vmem:[%s0 + $0x78] sm:$0xf]
  %v46 = vld [vmem:[%s0 + $0x7c] sm:$0xf]
  %v47 = vld [vmem:[%s0 + $0x80] sm:$0xf]
  %v48 = vld [vmem:[%s0 + $0x84] sm:$0xf]
  %v49 = vld [vmem:[%s0 + $0x88] sm:$0xf]
  %v50 = vld [vmem:[%s0 + $0x8c] sm:$0xf]
  %v51 = vld [vmem:[%s0 + $0x90] sm:$0xf]
  %v52 = vld [vmem:[%s0 + $0x94] sm:$0xf]
  %v53 = vld [vmem:[%s0 + $0x98] sm:$0xf]
  %v54 = vld [vmem:[%s0 + $0x9c] sm:$0xf]
  %v55 = vld [vmem:[%s0 + $0xa0] sm:$0xf]
  %v56 = vld [vmem:[%s0 + $0xa4] sm:$0xf]
  %v57 = vld [vmem:[%s0 + $0xa8] sm:$0xf]
  %v58 = vld [vmem:[%s0 + $0xac] sm:$0xf]
  %v59 = vld [vmem:[%s0 + $0xb0] sm:$0xf]
  %v60 = vld [vmem:[%s0 + $0xb4] sm:$0xf]
  %v61 = vld [vmem:[%s0 + $0xb8] sm:$0xf]
  %v62 = vld [vmem:[%s0 + $0xbc] sm:$0xf]
  %v63 = vld [vmem:[%s0 + $0xc0] sm:$0xf]
  %v64 = vld [vmem:[%s0 + $0xc4] sm:$0xf]
  %v65 = vld [vmem:[%s0 + $0xc8] sm:$0xf]
  %v66 = vld [vmem:[%s0 + $0xcc] sm:$0xf]
  %v67 = vld [vmem:[%s0 + $0xd0] sm:$0xf]
  %v68 = vld [vmem:[%s0 + $0xd4] sm:$0xf]
  %v69 = vld [vmem:[%s0 + $0xd8] sm:$0xf]
  %v70 = vld [vmem:[%s0 + $0xdc] sm:$0xf]
  %v71 = vld [vmem:[%s0 + $0xe0] sm:$0xf]
  %v72 = vld [vmem:[%s0 + $0xe4] sm:$0xf]
  %v73 = vld [vmem:[%s0 + $0xe8] sm:$0xf]
  %v74 = vld [vmem:[%s0 + $0xec] sm:$0xf]
  %v75 = vld [vmem:[%s0 + $0xf0] sm:$0xf]
  %v76 = vld [vmem:[%s0 + $0xf4] sm:$0xf]
  %v77 = vld [vmem:[%s0 + $0xf8] sm:$0xf]
  %v78 = vld [vmem:[%s0 + $0xfc] sm:$0xf]
  %v79 = vld [vmem:[%s1] sm:$0xf]
  %v80 = vld [vmem:[%s1 + $0x4] sm:$0xf]
  %v81 = vld [vmem:[%s1 + $0x8] sm:$0xf]
  %v82 = vld [vmem:[%s1 + $0xc] sm:$0x3]
  %v83 = vld [vmem:[%s2] sm:$0x1]
  %v85 = vlaneseq
  %v86 = vshrl.u32 %v85, 7
  %v87 = vsub.s32 0, %v86
  %v88 = vrot.slane %v83, %v87
  %v154 = vunpack.c.l.b16 %v15
  %v155 = vunpack.c.l.b16 %v16
  %v156 = vunpack.c.l.b16 %v17
  %v157 = vunpack.c.l.b16 %v18
  %v158 = vunpack.c.l.b16 %v19
  %v159 = vunpack.c.l.b16 %v20
  %v160 = vunpack.c.l.b16 %v21
  %v161 = vunpack.c.l.b16 %v22
  %v162 = vunpack.c.l.b16 %v23
  %v163 = vunpack.c.l.b16 %v24
  %v164 = vunpack.c.l.b16 %v25
  %v165 = vunpack.c.l.b16 %v26
  %v166 = vunpack.c.l.b16 %v27
  %v167 = vunpack.c.l.b16 %v28
  %v168 = vunpack.c.l.b16 %v29
  %v169 = vunpack.c.l.b16 %v30
  %v170 = vunpack.c.l.b16 %v31
  %v171 = vunpack.c.l.b16 %v32
  %v172 = vunpack.c.l.b16 %v33
  %v173 = vunpack.c.l.b16 %v34
  %v174 = vunpack.c.l.b16 %v35
  %v175 = vunpack.c.l.b16 %v36
  %v176 = vunpack.c.l.b16 %v37
  %v177 = vunpack.c.l.b16 %v38
  %v178 = vunpack.c.l.b16 %v39
  %v179 = vunpack.c.l.b16 %v40
  %v180 = vunpack.c.l.b16 %v41
  %v181 = vunpack.c.l.b16 %v42
  %v182 = vunpack.c.l.b16 %v43
  %v183 = vunpack.c.l.b16 %v44
  %v184 = vunpack.c.l.b16 %v45
  %v185 = vunpack.c.l.b16 %v46
  %v186 = vunpack.c.l.b16 %v47
  %v187 = vunpack.c.l.b16 %v48
  %v188 = vunpack.c.l.b16 %v49
  %v189 = vunpack.c.l.b16 %v50
  %v190 = vunpack.c.l.b16 %v51
  %v191 = vunpack.c.l.b16 %v52
  %v192 = vunpack.c.l.b16 %v53
  %v193 = vunpack.c.l.b16 %v54
  %v194 = vunpack.c.l.b16 %v55
  %v195 = vunpack.c.l.b16 %v56
  %v196 = vunpack.c.l.b16 %v57
  %v197 = vunpack.c.l.b16 %v58
  %v198 = vunpack.c.l.b16 %v59
  %v199 = vunpack.c.l.b16 %v60
  %v200 = vunpack.c.l.b16 %v61
  %v201 = vunpack.c.l.b16 %v62
  %v202 = vunpack.c.l.b16 %v63
  %v203 = vunpack.c.l.b16 %v64
  %v204 = vunpack.c.l.b16 %v65
  %v205 = vunpack.c.l.b16 %v66
  %v206 = vunpack.c.l.b16 %v67
  %v207 = vunpack.c.l.b16 %v68
  %v208 = vunpack.c.l.b16 %v69
  %v209 = vunpack.c.l.b16 %v70
  %v210 = vunpack.c.l.b16 %v71
  %v211 = vunpack.c.l.b16 %v72
  %v212 = vunpack.c.l.b16 %v73
  %v213 = vunpack.c.l.b16 %v74
  %v214 = vunpack.c.l.b16 %v75
  %v215 = vunpack.c.l.b16 %v76
  %v216 = vunpack.c.l.b16 %v77
  %v217 = vunpack.c.l.b16 %v78
  %v218 = vpack.c.b16 %v155, %v154
  %v219 = vpack.c.b16 %v157, %v156
  %v220 = vpack.c.b16 %v159, %v158
  %v221 = vpack.c.b16 %v161, %v160
  %v222 = vpack.c.b16 %v163, %v162
  %v223 = vpack.c.b16 %v165, %v164
  %v224 = vpack.c.b16 %v167, %v166
  %v225 = vpack.c.b16 %v169, %v168
  %v226 = vpack.c.b16 %v171, %v170
  %v227 = vpack.c.b16 %v173, %v172
  %v228 = vpack.c.b16 %v175, %v174
  %v229 = vpack.c.b16 %v177, %v176
  %v230 = vpack.c.b16 %v179, %v178
  %v231 = vpack.c.b16 %v181, %v180
  %v232 = vpack.c.b16 %v183, %v182
  %v233 = vpack.c.b16 %v185, %v184
  %v234 = vpack.c.b16 %v187, %v186
  %v235 = vpack.c.b16 %v189, %v188
  %v236 = vpack.c.b16 %v191, %v190
  %v237 = vpack.c.b16 %v193, %v192
  %v238 = vpack.c.b16 %v195, %v194
  %v239 = vpack.c.b16 %v197, %v196
  %v240 = vpack.c.b16 %v199, %v198
  %v241 = vpack.c.b16 %v201, %v200
  %v242 = vpack.c.b16 %v203, %v202
  %v243 = vpack.c.b16 %v205, %v204
  %v244 = vpack.c.b16 %v207, %v206
  %v245 = vpack.c.b16 %v209, %v208
  %v246 = vpack.c.b16 %v211, %v210
  %v247 = vpack.c.b16 %v213, %v212
  %v248 = vpack.c.b16 %v215, %v214
  %v249 = vpack.c.b16 %v217, %v216
  %v254 = vunpack.c.l.b16 %v79
  %v255 = vunpack.c.l.b16 %v80
  %v256 = vunpack.c.l.b16 %v81
  %v257 = vunpack.c.l.b16 %v82
  %v258 = vpack.c.b16 %v255, %v254
  %v259 = vpack.c.b16 %v257, %v256
  %vm261 = vcmask 220160
  %v263 = vsel %vm261, %v218, 0
  %v266 = vsel %vm261, %v219, 0
  %v269 = vsel %vm261, %v220, 0
  %v272 = vsel %vm261, %v221, 0
  %v275 = vsel %vm261, %v222, 0
  %v278 = vsel %vm261, %v223, 0
  %v281 = vsel %vm261, %v224, 0
  %v284 = vsel %vm261, %v225, 0
  %v287 = vsel %vm261, %v226, 0
  %v290 = vsel %vm261, %v227, 0
  %v293 = vsel %vm261, %v228, 0
  %v296 = vsel %vm261, %v229, 0
  %v299 = vsel %vm261, %v230, 0
  %v302 = vsel %vm261, %v231, 0
  %v305 = vsel %vm261, %v232, 0
  %v308 = vsel %vm261, %v233, 0
  %v311 = vsel %vm261, %v234, 0
  %v314 = vsel %vm261, %v235, 0
  %v317 = vsel %vm261, %v236, 0
  %v320 = vsel %vm261, %v237, 0
  %v323 = vsel %vm261, %v238, 0
  %v326 = vsel %vm261, %v239, 0
  %v329 = vsel %vm261, %v240, 0
  %v332 = vsel %vm261, %v241, 0
  %v335 = vsel %vm261, %v242, 0
  %v338 = vsel %vm261, %v243, 0
  %v341 = vsel %vm261, %v244, 0
  %v344 = vsel %vm261, %v245, 0
  %v347 = vsel %vm261, %v246, 0
  %v350 = vsel %vm261, %v247, 0
  %v353 = vsel %vm261, %v248, 0
  %v356 = vsel %vm261, %v249, 0
  %vm358 = vcmask 1044480
  %vm359 = vcmask 1045504
  %v360 = vsel %vm358, 4294967295, 65535
  %v361 = vsel %vm359, %v360, 0
  %v363 = vand.u32 %v259, %v361
  %365 = vmatprep.subr.bf16.mxu0 0
  %366 = vmatpush1.bf16.msra.mxu0 %v258
  %367 = vmatprep.subr.bf16.mxu0 0
  %368 = vmatpush1.bf16.msra.mxu0 %v363
  %369 = vmatprep.subr.bf16.mxu0 0
  %370 = vmatpush1.bf16.msra.mxu0 0
  %371 = vmatprep.subr.bf16.mxu0 0
  %372 = vmatpush1.bf16.msra.mxu0 0
  %373 = vmatprep.subr.bf16.mxu0 0
  %374 = vmatpush1.bf16.msra.mxu0 0
  %375 = vmatprep.subr.bf16.mxu0 0
  %376 = vmatpush1.bf16.msra.mxu0 0
  %377 = vmatprep.subr.bf16.mxu0 0
  %378 = vmatpush1.bf16.msra.mxu0 0
  %379 = vmatprep.subr.bf16.mxu0 0
  %380 = vmatpush1.bf16.msra.mxu0 0
  %381 = vmatprep.subr.bf16.mxu0 0
  %382 = vmatpush1.bf16.msra.mxu0 0
  %383 = vmatprep.subr.bf16.mxu0 0
  %384 = vmatpush1.bf16.msra.mxu0 0
  %385 = vmatprep.subr.bf16.mxu0 0
  %386 = vmatpush1.bf16.msra.mxu0 0
  %387 = vmatprep.subr.bf16.mxu0 0
  %388 = vmatpush1.bf16.msra.mxu0 0
  %389 = vmatprep.subr.bf16.mxu0 0
  %390 = vmatpush1.bf16.msra.mxu0 0
  %391 = vmatprep.subr.bf16.mxu0 0
  %392 = vmatpush1.bf16.msra.mxu0 0
  %393 = vmatprep.subr.bf16.mxu0 0
  %394 = vmatpush1.bf16.msra.mxu0 0
  %395 = vmatprep.subr.bf16.mxu0 0
  %396 = vmatpush1.bf16.msra.mxu0 0
  %397 = vmatprep.mubr.bf16.mxu0 0
  %398 = vmatmul.mubr.bf16.gmra.mrb[0].mxu0 %v263
  %v399 = vpop.f32.mrb[0].mxu0
  %v400 = vadd.f32 %v88, %v399
  %v401 = vpop.f32.mrb[0].mxu0
  %v402 = vpop.f32.mrb[0].mxu0
  %v403 = vadd.f32 %v88, %v402
  %v404 = vpop.f32.mrb[0].mxu0
  %405 = vmatprep.mubr.bf16.mxu0 0
  %406 = vmatmul.mubr.bf16.gmra.mrb[0].mxu0 %v266
  %v407 = vpop.f32.mrb[0].mxu0
  %v408 = vadd.f32 %v88, %v407
  %v409 = vpop.f32.mrb[0].mxu0
  %v410 = vpop.f32.mrb[0].mxu0
  %v411 = vadd.f32 %v88, %v410
  %v412 = vpop.f32.mrb[0].mxu0
  %413 = vmatprep.mubr.bf16.mxu0 0
  %414 = vmatmul.mubr.bf16.gmra.mrb[0].mxu0 %v269
  %v415 = vpop.f32.mrb[0].mxu0
  %v416 = vadd.f32 %v88, %v415
  %v417 = vpop.f32.mrb[0].mxu0
  %v418 = vpop.f32.mrb[0].mxu0
  %v419 = vadd.f32 %v88, %v418
  %v420 = vpop.f32.mrb[0].mxu0
  %421 = vmatprep.mubr.bf16.mxu0 0
  %422 = vmatmul.mubr.bf16.gmra.mrb[0].mxu0 %v272
  %v423 = vpop.f32.mrb[0].mxu0
  %v424 = vadd.f32 %v88, %v423
  %v425 = vpop.f32.mrb[0].mxu0
  %v426 = vpop.f32.mrb[0].mxu0
  %v427 = vadd.f32 %v88, %v426
  %v428 = vpop.f32.mrb[0].mxu0
  %429 = vmatprep.mubr.bf16.mxu0 0
  %430 = vmatmul.mubr.bf16.gmra.mrb[0].mxu0 %v275
  %v431 = vpop.f32.mrb[0].mxu0
  %v432 = vadd.f32 %v88, %v431
  %v433 = vpop.f32.mrb[0].mxu0
  %v434 = vpop.f32.mrb[0].mxu0
  %v435 = vadd.f32 %v88, %v434
  %v436 = vpop.f32.mrb[0].mxu0
  %437 = vmatprep.mubr.bf16.mxu0 0
  %438 = vmatmul.mubr.bf16.gmra.mrb[0].mxu0 %v278
  %v439 = vpop.f32.mrb[0].mxu0
  %v440 = vadd.f32 %v88, %v439
  %v441 = vpop.f32.mrb[0].mxu0
  %v442 = vpop.f32.mrb[0].mxu0
  %v443 = vadd.f32 %v88, %v442
  %v444 = vpop.f32.mrb[0].mxu0
  %445 = vmatprep.mubr.bf16.mxu0 0
  %446 = vmatmul.mubr.bf16.gmra.mrb[0].mxu0 %v281
  %v447 = vpop.f32.mrb[0].mxu0
  %v448 = vadd.f32 %v88, %v447
  %v449 = vpop.f32.mrb[0].mxu0
  %v450 = vpop.f32.mrb[0].mxu0
  %v451 = vadd.f32 %v88, %v450
  %v452 = vpop.f32.mrb[0].mxu0
  %453 = vmatprep.mubr.bf16.mxu0 0
  %454 = vmatmul.mubr.bf16.gmra.mrb[0].mxu0 %v284
  %v455 = vpop.f32.mrb[0].mxu0
  %v456 = vadd.f32 %v88, %v455
  %v457 = vpop.f32.mrb[0].mxu0
  %v458 = vpop.f32.mrb[0].mxu0
  %v459 = vadd.f32 %v88, %v458
  %v460 = vpop.f32.mrb[0].mxu0
  %461 = vmatprep.mubr.bf16.mxu0 0
  %462 = vmatmul.mubr.bf16.gmra.mrb[0].mxu0 %v287
  %v463 = vpop.f32.mrb[0].mxu0
  %v464 = vadd.f32 %v88, %v463
  %v465 = vpop.f32.mrb[0].mxu0
  %v466 = vpop.f32.mrb[0].mxu0
  %v467 = vadd.f32 %v88, %v466
  %v468 = vpop.f32.mrb[0].mxu0
  %469 = vmatprep.mubr.bf16.mxu0 0
  %470 = vmatmul.mubr.bf16.gmra.mrb[0].mxu0 %v290
  %v471 = vpop.f32.mrb[0].mxu0
  %v472 = vadd.f32 %v88, %v471
  %v473 = vpop.f32.mrb[0].mxu0
  %v474 = vpop.f32.mrb[0].mxu0
  %v475 = vadd.f32 %v88, %v474
  %v476 = vpop.f32.mrb[0].mxu0
  %477 = vmatprep.mubr.bf16.mxu0 0
  %478 = vmatmul.mubr.bf16.gmra.mrb[0].mxu0 %v293
  %v479 = vpop.f32.mrb[0].mxu0
  %v480 = vadd.f32 %v88, %v479
  %v481 = vpop.f32.mrb[0].mxu0
  %v482 = vpop.f32.mrb[0].mxu0
  %v483 = vadd.f32 %v88, %v482
  %v484 = vpop.f32.mrb[0].mxu0
  %485 = vmatprep.mubr.bf16.mxu0 0
  %486 = vmatmul.mubr.bf16.gmra.mrb[0].mxu0 %v296
  %v487 = vpop.f32.mrb[0].mxu0
  %v488 = vadd.f32 %v88, %v487
  %v489 = vpop.f32.mrb[0].mxu0
  %v490 = vpop.f32.mrb[0].mxu0
  %v491 = vadd.f32 %v88, %v490
  %v492 = vpop.f32.mrb[0].mxu0
  %493 = vmatprep.mubr.bf16.mxu0 0
  %494 = vmatmul.mubr.bf16.gmra.mrb[0].mxu0 %v299
  %v495 = vpop.f32.mrb[0].mxu0
  %v496 = vadd.f32 %v88, %v495
  %v497 = vpop.f32.mrb[0].mxu0
  %v498 = vpop.f32.mrb[0].mxu0
  %v499 = vadd.f32 %v88, %v498
  %v500 = vpop.f32.mrb[0].mxu0
  %501 = vmatprep.mubr.bf16.mxu0 0
  %502 = vmatmul.mubr.bf16.gmra.mrb[0].mxu0 %v302
  %v503 = vpop.f32.mrb[0].mxu0
  %v504 = vadd.f32 %v88, %v503
  %v505 = vpop.f32.mrb[0].mxu0
  %v506 = vpop.f32.mrb[0].mxu0
  %v507 = vadd.f32 %v88, %v506
  %v508 = vpop.f32.mrb[0].mxu0
  %509 = vmatprep.mubr.bf16.mxu0 0
  %510 = vmatmul.mubr.bf16.gmra.mrb[0].mxu0 %v305
  %v511 = vpop.f32.mrb[0].mxu0
  %v512 = vadd.f32 %v88, %v511
  %v513 = vpop.f32.mrb[0].mxu0
  %v514 = vpop.f32.mrb[0].mxu0
  %v515 = vadd.f32 %v88, %v514
  %v516 = vpop.f32.mrb[0].mxu0
  %517 = vmatprep.mubr.bf16.mxu0 0
  %518 = vmatmul.mubr.bf16.gmra.mrb[0].mxu0 %v308
  %v519 = vpop.f32.mrb[0].mxu0
  %v520 = vadd.f32 %v88, %v519
  %v521 = vpop.f32.mrb[0].mxu0
  %v522 = vpop.f32.mrb[0].mxu0
  %v523 = vadd.f32 %v88, %v522
  %v524 = vpop.f32.mrb[0].mxu0
  %525 = vmatprep.mubr.bf16.mxu0 0
  %526 = vmatmul.mubr.bf16.gmra.mrb[0].mxu0 %v311
  %v527 = vpop.f32.mrb[0].mxu0
  %v528 = vadd.f32 %v88, %v527
  %v529 = vpop.f32.mrb[0].mxu0
  %v530 = vpop.f32.mrb[0].mxu0
  %v531 = vadd.f32 %v88, %v530
  %v532 = vpop.f32.mrb[0].mxu0
  %533 = vmatprep.mubr.bf16.mxu0 0
  %534 = vmatmul.mubr.bf16.gmra.mrb[0].mxu0 %v314
  %v535 = vpop.f32.mrb[0].mxu0
  %v536 = vadd.f32 %v88, %v535
  %v537 = vpop.f32.mrb[0].mxu0
  %v538 = vpop.f32.mrb[0].mxu0
  %v539 = vadd.f32 %v88, %v538
  %v540 = vpop.f32.mrb[0].mxu0
  %541 = vmatprep.mubr.bf16.mxu0 0
  %542 = vmatmul.mubr.bf16.gmra.mrb[0].mxu0 %v317
  %v543 = vpop.f32.mrb[0].mxu0
  %v544 = vadd.f32 %v88, %v543
  %v545 = vpop.f32.mrb[0].mxu0
  %v546 = vpop.f32.mrb[0].mxu0
  %v547 = vadd.f32 %v88, %v546
  %v548 = vpop.f32.mrb[0].mxu0
  %549 = vmatprep.mubr.bf16.mxu0 0
  %550 = vmatmul.mubr.bf16.gmra.mrb[0].mxu0 %v320
  %v551 = vpop.f32.mrb[0].mxu0
  %v552 = vadd.f32 %v88, %v551
  %v553 = vpop.f32.mrb[0].mxu0
  %v554 = vpop.f32.mrb[0].mxu0
  %v555 = vadd.f32 %v88, %v554
  %v556 = vpop.f32.mrb[0].mxu0
  %557 = vmatprep.mubr.bf16.mxu0 0
  %558 = vmatmul.mubr.bf16.gmra.mrb[0].mxu0 %v323
  %v559 = vpop.f32.mrb[0].mxu0
  %v560 = vadd.f32 %v88, %v559
  %v561 = vpop.f32.mrb[0].mxu0
  %v562 = vpop.f32.mrb[0].mxu0
  %v563 = vadd.f32 %v88, %v562
  %v564 = vpop.f32.mrb[0].mxu0
  %565 = vmatprep.mubr.bf16.mxu0 0
  %566 = vmatmul.mubr.bf16.gmra.mrb[0].mxu0 %v326
  %v567 = vpop.f32.mrb[0].mxu0
  %v568 = vadd.f32 %v88, %v567
  %v569 = vpop.f32.mrb[0].mxu0
  %v570 = vpop.f32.mrb[0].mxu0
  %v571 = vadd.f32 %v88, %v570
  %v572 = vpop.f32.mrb[0].mxu0
  %573 = vmatprep.mubr.bf16.mxu0 0
  %574 = vmatmul.mubr.bf16.gmra.mrb[0].mxu0 %v329
  %v575 = vpop.f32.mrb[0].mxu0
  %v576 = vadd.f32 %v88, %v575
  %v577 = vpop.f32.mrb[0].mxu0
  %v578 = vpop.f32.mrb[0].mxu0
  %v579 = vadd.f32 %v88, %v578
  %v580 = vpop.f32.mrb[0].mxu0
  %581 = vmatprep.mubr.bf16.mxu0 0
  %582 = vmatmul.mubr.bf16.gmra.mrb[0].mxu0 %v332
  %v583 = vpop.f32.mrb[0].mxu0
  %v584 = vadd.f32 %v88, %v583
  %v585 = vpop.f32.mrb[0].mxu0
  %v586 = vpop.f32.mrb[0].mxu0
  %v587 = vadd.f32 %v88, %v586
  %v588 = vpop.f32.mrb[0].mxu0
  %589 = vmatprep.mubr.bf16.mxu0 0
  %590 = vmatmul.mubr.bf16.gmra.mrb[0].mxu0 %v335
  %v591 = vpop.f32.mrb[0].mxu0
  %v592 = vadd.f32 %v88, %v591
  %v593 = vpop.f32.mrb[0].mxu0
  %v594 = vpop.f32.mrb[0].mxu0
  %v595 = vadd.f32 %v88, %v594
  %v596 = vpop.f32.mrb[0].mxu0
  %597 = vmatprep.mubr.bf16.mxu0 0
  %598 = vmatmul.mubr.bf16.gmra.mrb[0].mxu0 %v338
  %v599 = vpop.f32.mrb[0].mxu0
  %v600 = vadd.f32 %v88, %v599
  %v601 = vpop.f32.mrb[0].mxu0
  %v602 = vpop.f32.mrb[0].mxu0
  %v603 = vadd.f32 %v88, %v602
  %v604 = vpop.f32.mrb[0].mxu0
  %605 = vmatprep.mubr.bf16.mxu0 0
  %606 = vmatmul.mubr.bf16.gmra.mrb[0].mxu0 %v341
  %v607 = vpop.f32.mrb[0].mxu0
  %v608 = vadd.f32 %v88, %v607
  %v609 = vpop.f32.mrb[0].mxu0
  %v610 = vpop.f32.mrb[0].mxu0
  %v611 = vadd.f32 %v88, %v610
  %v612 = vpop.f32.mrb[0].mxu0
  %613 = vmatprep.mubr.bf16.mxu0 0
  %614 = vmatmul.mubr.bf16.gmra.mrb[0].mxu0 %v344
  %v615 = vpop.f32.mrb[0].mxu0
  %v616 = vadd.f32 %v88, %v615
  %v617 = vpop.f32.mrb[0].mxu0
  %v618 = vpop.f32.mrb[0].mxu0
  %v619 = vadd.f32 %v88, %v618
  %v620 = vpop.f32.mrb[0].mxu0
  %621 = vmatprep.mubr.bf16.mxu0 0
  %622 = vmatmul.mubr.bf16.gmra.mrb[0].mxu0 %v347
  %v623 = vpop.f32.mrb[0].mxu0
  %v624 = vadd.f32 %v88, %v623
  %v625 = vpop.f32.mrb[0].mxu0
  %v626 = vpop.f32.mrb[0].mxu0
  %v627 = vadd.f32 %v88, %v626
  %v628 = vpop.f32.mrb[0].mxu0
  %629 = vmatprep.mubr.bf16.mxu0 0
  %630 = vmatmul.mubr.bf16.gmra.mrb[0].mxu0 %v350
  %v631 = vpop.f32.mrb[0].mxu0
  %v632 = vadd.f32 %v88, %v631
  %v633 = vpop.f32.mrb[0].mxu0
  %v634 = vpop.f32.mrb[0].mxu0
  %v635 = vadd.f32 %v88, %v634
  %v636 = vpop.f32.mrb[0].mxu0
  %637 = vmatprep.mubr.bf16.mxu0 0
  %638 = vmatmul.mubr.bf16.gmra.mrb[0].mxu0 %v353
  %v639 = vpop.f32.mrb[0].mxu0
  %v640 = vadd.f32 %v88, %v639
  %v641 = vpop.f32.mrb[0].mxu0
  %v642 = vpop.f32.mrb[0].mxu0
  %v643 = vadd.f32 %v88, %v642
  %v644 = vpop.f32.mrb[0].mxu0
  %645 = vmatprep.mubr.bf16.mxu0 0
  %646 = vmatmul.mubr.bf16.gmra.mrb[0].mxu0 %v356
  %v647 = vpop.f32.mrb[0].mxu0
  %v648 = vadd.f32 %v88, %v647
  %v649 = vpop.f32.mrb[0].mxu0
  %v650 = vpop.f32.mrb[0].mxu0
  %v651 = vadd.f32 %v88, %v650
  %v652 = vpop.f32.mrb[0].mxu0
  %653 = vdwg.mxu0
  %v654 = vmax.f32 %v400, 0.0
  %v655 = vmax.f32 %v403, 0.0
  %v656 = vmax.f32 %v408, 0.0
  %v657 = vmax.f32 %v411, 0.0
  %v658 = vmax.f32 %v416, 0.0
  %v659 = vmax.f32 %v419, 0.0
  %v660 = vmax.f32 %v424, 0.0
  %v661 = vmax.f32 %v427, 0.0
  %v662 = vmax.f32 %v432, 0.0
  %v663 = vmax.f32 %v435, 0.0
  %v664 = vmax.f32 %v440, 0.0
  %v665 = vmax.f32 %v443, 0.0
  %v666 = vmax.f32 %v448, 0.0
  %v667 = vmax.f32 %v451, 0.0
  %v668 = vmax.f32 %v456, 0.0
  %v669 = vmax.f32 %v459, 0.0
  %v670 = vmax.f32 %v464, 0.0
  %v671 = vmax.f32 %v467, 0.0
  %v672 = vmax.f32 %v472, 0.0
  %v673 = vmax.f32 %v475, 0.0
  %v674 = vmax.f32 %v480, 0.0
  %v675 = vmax.f32 %v483, 0.0
  %v676 = vmax.f32 %v488, 0.0
  %v677 = vmax.f32 %v491, 0.0
  %v678 = vmax.f32 %v496, 0.0
  %v679 = vmax.f32 %v499, 0.0
  %v680 = vmax.f32 %v504, 0.0
  %v681 = vmax.f32 %v507, 0.0
  %v682 = vmax.f32 %v512, 0.0
  %v683 = vmax.f32 %v515, 0.0
  %v684 = vmax.f32 %v520, 0.0
  %v685 = vmax.f32 %v523, 0.0
  %v686 = vmax.f32 %v528, 0.0
  %v687 = vmax.f32 %v531, 0.0
  %v688 = vmax.f32 %v536, 0.0
  %v689 = vmax.f32 %v539, 0.0
  %v690 = vmax.f32 %v544, 0.0
  %v691 = vmax.f32 %v547, 0.0
  %v692 = vmax.f32 %v552, 0.0
  %v693 = vmax.f32 %v555, 0.0
  %v694 = vmax.f32 %v560, 0.0
  %v695 = vmax.f32 %v563, 0.0
  %v696 = vmax.f32 %v568, 0.0
  %v697 = vmax.f32 %v571, 0.0
  %v698 = vmax.f32 %v576, 0.0
  %v699 = vmax.f32 %v579, 0.0
  %v700 = vmax.f32 %v584, 0.0
  %v701 = vmax.f32 %v587, 0.0
  %v702 = vmax.f32 %v592, 0.0
  %v703 = vmax.f32 %v595, 0.0
  %v704 = vmax.f32 %v600, 0.0
  %v705 = vmax.f32 %v603, 0.0
  %v706 = vmax.f32 %v608, 0.0
  %v707 = vmax.f32 %v611, 0.0
  %v708 = vmax.f32 %v616, 0.0
  %v709 = vmax.f32 %v619, 0.0
  %v710 = vmax.f32 %v624, 0.0
  %v711 = vmax.f32 %v627, 0.0
  %v712 = vmax.f32 %v632, 0.0
  %v713 = vmax.f32 %v635, 0.0
  %v714 = vmax.f32 %v640, 0.0
  %v715 = vmax.f32 %v643, 0.0
  %v716 = vmax.f32 %v648, 0.0
  %v717 = vmax.f32 %v651, 0.0
  %v718 = vpack.c.bf16 %v655, %v654
  %v719 = vpack.c.bf16 %v657, %v656
  %v720 = vpack.c.bf16 %v659, %v658
  %v721 = vpack.c.bf16 %v661, %v660
  %v722 = vpack.c.bf16 %v663, %v662
  %v723 = vpack.c.bf16 %v665, %v664
  %v724 = vpack.c.bf16 %v667, %v666
  %v725 = vpack.c.bf16 %v669, %v668
  %v726 = vpack.c.bf16 %v671, %v670
  %v727 = vpack.c.bf16 %v673, %v672
  %v728 = vpack.c.bf16 %v675, %v674
  %v729 = vpack.c.bf16 %v677, %v676
  %v730 = vpack.c.bf16 %v679, %v678
  %v731 = vpack.c.bf16 %v681, %v680
  %v732 = vpack.c.bf16 %v683, %v682
  %v733 = vpack.c.bf16 %v685, %v684
  %v734 = vpack.c.bf16 %v687, %v686
  %v735 = vpack.c.bf16 %v689, %v688
  %v736 = vpack.c.bf16 %v691, %v690
  %v737 = vpack.c.bf16 %v693, %v692
  %v738 = vpack.c.bf16 %v695, %v694
  %v739 = vpack.c.bf16 %v697, %v696
  %v740 = vpack.c.bf16 %v699, %v698
  %v741 = vpack.c.bf16 %v701, %v700
  %v742 = vpack.c.bf16 %v703, %v702
  %v743 = vpack.c.bf16 %v705, %v704
  %v744 = vpack.c.bf16 %v707, %v706
  %v745 = vpack.c.bf16 %v709, %v708
  %v746 = vpack.c.bf16 %v711, %v710
  %v747 = vpack.c.bf16 %v713, %v712
  %v748 = vpack.c.bf16 %v715, %v714
  %v749 = vpack.c.bf16 %v717, %v716
  %v782 = vunpack.c.l.b16 %v718
  %v783 = vunpack.c.h.b16 %v718
  %v784 = vunpack.c.l.b16 %v719
  %v785 = vunpack.c.h.b16 %v719
  %v786 = vunpack.c.l.b16 %v720
  %v787 = vunpack.c.h.b16 %v720
  %v788 = vunpack.c.l.b16 %v721
  %v789 = vunpack.c.h.b16 %v721
  %v790 = vunpack.c.l.b16 %v722
  %v791 = vunpack.c.h.b16 %v722
  %v792 = vunpack.c.l.b16 %v723
  %v793 = vunpack.c.h.b16 %v723
  %v794 = vunpack.c.l.b16 %v724
  %v795 = vunpack.c.h.b16 %v724
  %v796 = vunpack.c.l.b16 %v725
  %v797 = vunpack.c.h.b16 %v725
  %v798 = vunpack.c.l.b16 %v726
  %v799 = vunpack.c.h.b16 %v726
  %v800 = vunpack.c.l.b16 %v727
  %v801 = vunpack.c.h.b16 %v727
  %v802 = vunpack.c.l.b16 %v728
  %v803 = vunpack.c.h.b16 %v728
  %v804 = vunpack.c.l.b16 %v729
  %v805 = vunpack.c.h.b16 %v729
  %v806 = vunpack.c.l.b16 %v730
  %v807 = vunpack.c.h.b16 %v730
  %v808 = vunpack.c.l.b16 %v731
  %v809 = vunpack.c.h.b16 %v731
  %v810 = vunpack.c.l.b16 %v732
  %v811 = vunpack.c.h.b16 %v732
  %v812 = vunpack.c.l.b16 %v733
  %v813 = vunpack.c.h.b16 %v733
  %v814 = vunpack.c.l.b16 %v734
  %v815 = vunpack.c.h.b16 %v734
  %v816 = vunpack.c.l.b16 %v735
  %v817 = vunpack.c.h.b16 %v735
  %v818 = vunpack.c.l.b16 %v736
  %v819 = vunpack.c.h.b16 %v736
  %v820 = vunpack.c.l.b16 %v737
  %v821 = vunpack.c.h.b16 %v737
  %v822 = vunpack.c.l.b16 %v738
  %v823 = vunpack.c.h.b16 %v738
  %v824 = vunpack.c.l.b16 %v739
  %v825 = vunpack.c.h.b16 %v739
  %v826 = vunpack.c.l.b16 %v740
  %v827 = vunpack.c.h.b16 %v740
  %v828 = vunpack.c.l.b16 %v741
  %v829 = vunpack.c.h.b16 %v741
  %v830 = vunpack.c.l.b16 %v742
  %v831 = vunpack.c.h.b16 %v742
  %v832 = vunpack.c.l.b16 %v743
  %v833 = vunpack.c.h.b16 %v743
  %v834 = vunpack.c.l.b16 %v744
  %v835 = vunpack.c.h.b16 %v744
  %v836 = vunpack.c.l.b16 %v745
  %v837 = vunpack.c.h.b16 %v745
  %v838 = vunpack.c.l.b16 %v746
  %v839 = vunpack.c.h.b16 %v746
  %v840 = vunpack.c.l.b16 %v747
  %v841 = vunpack.c.h.b16 %v747
  %v842 = vunpack.c.l.b16 %v748
  %v843 = vunpack.c.h.b16 %v748
  %v844 = vunpack.c.l.b16 %v749
  %v845 = vunpack.c.h.b16 %v749
  %v846 = vpack.c.b16 %v782, %v782
  %v847 = vpack.c.b16 %v783, %v783
  %v848 = vpack.c.b16 %v784, %v784
  %v849 = vpack.c.b16 %v785, %v785
  %v850 = vpack.c.b16 %v786, %v786
  %v851 = vpack.c.b16 %v787, %v787
  %v852 = vpack.c.b16 %v788, %v788
  %v853 = vpack.c.b16 %v789, %v789
  %v854 = vpack.c.b16 %v790, %v790
  %v855 = vpack.c.b16 %v791, %v791
  %v856 = vpack.c.b16 %v792, %v792
  %v857 = vpack.c.b16 %v793, %v793
  %v858 = vpack.c.b16 %v794, %v794
  %v859 = vpack.c.b16 %v795, %v795
  %v860 = vpack.c.b16 %v796, %v796
  %v861 = vpack.c.b16 %v797, %v797
  %v862 = vpack.c.b16 %v798, %v798
  %v863 = vpack.c.b16 %v799, %v799
  %v864 = vpack.c.b16 %v800, %v800
  %v865 = vpack.c.b16 %v801, %v801
  %v866 = vpack.c.b16 %v802, %v802
  %v867 = vpack.c.b16 %v803, %v803
  %v868 = vpack.c.b16 %v804, %v804
  %v869 = vpack.c.b16 %v805, %v805
  %v870 = vpack.c.b16 %v806, %v806
  %v871 = vpack.c.b16 %v807, %v807
  %v872 = vpack.c.b16 %v808, %v808
  %v873 = vpack.c.b16 %v809, %v809
  %v874 = vpack.c.b16 %v810, %v810
  %v875 = vpack.c.b16 %v811, %v811
  %v876 = vpack.c.b16 %v812, %v812
  %v877 = vpack.c.b16 %v813, %v813
  %v878 = vpack.c.b16 %v814, %v814
  %v879 = vpack.c.b16 %v815, %v815
  %v880 = vpack.c.b16 %v816, %v816
  %v881 = vpack.c.b16 %v817, %v817
  %v882 = vpack.c.b16 %v818, %v818
  %v883 = vpack.c.b16 %v819, %v819
  %v884 = vpack.c.b16 %v820, %v820
  %v885 = vpack.c.b16 %v821, %v821
  %v886 = vpack.c.b16 %v822, %v822
  %v887 = vpack.c.b16 %v823, %v823
  %v888 = vpack.c.b16 %v824, %v824
  %v889 = vpack.c.b16 %v825, %v825
  %v890 = vpack.c.b16 %v826, %v826
  %v891 = vpack.c.b16 %v827, %v827
  %v892 = vpack.c.b16 %v828, %v828
  %v893 = vpack.c.b16 %v829, %v829
  %v894 = vpack.c.b16 %v830, %v830
  %v895 = vpack.c.b16 %v831, %v831
  %v896 = vpack.c.b16 %v832, %v832
  %v897 = vpack.c.b16 %v833, %v833
  %v898 = vpack.c.b16 %v834, %v834
  %v899 = vpack.c.b16 %v835, %v835
  %v900 = vpack.c.b16 %v836, %v836
  %v901 = vpack.c.b16 %v837, %v837
  %v902 = vpack.c.b16 %v838, %v838
  %v903 = vpack.c.b16 %v839, %v839
  %v904 = vpack.c.b16 %v840, %v840
  %v905 = vpack.c.b16 %v841, %v841
  %v906 = vpack.c.b16 %v842, %v842
  %v907 = vpack.c.b16 %v843, %v843
  %v908 = vpack.c.b16 %v844, %v844
  %v909 = vpack.c.b16 %v845, %v845
  %vm974 = vcmask 60416
  %975 = vst.msk [vmem:[%s3] sm:$0xf] %vm974, %v846
  %976 = vst.msk [vmem:[%s3 + $0x4] sm:$0xf] %vm974, %v847
  %977 = vst.msk [vmem:[%s3 + $0x8] sm:$0xf] %vm974, %v848
  %978 = vst.msk [vmem:[%s3 + $0xc] sm:$0xf] %vm974, %v849
  %979 = vst.msk [vmem:[%s3 + $0x10] sm:$0xf] %vm974, %v850
  %980 = vst.msk [vmem:[%s3 + $0x14] sm:$0xf] %vm974, %v851
  %981 = vst.msk [vmem:[%s3 + $0x18] sm:$0xf] %vm974, %v852
  %982 = vst.msk [vmem:[%s3 + $0x1c] sm:$0xf] %vm974, %v853
  %983 = vst.msk [vmem:[%s3 + $0x20] sm:$0xf] %vm974, %v854
  %984 = vst.msk [vmem:[%s3 + $0x24] sm:$0xf] %vm974, %v855
  %985 = vst.msk [vmem:[%s3 + $0x28] sm:$0xf] %vm974, %v856
  %986 = vst.msk [vmem:[%s3 + $0x2c] sm:$0xf] %vm974, %v857
  %987 = vst.msk [vmem:[%s3 + $0x30] sm:$0xf] %vm974, %v858
  %988 = vst.msk [vmem:[%s3 + $0x34] sm:$0xf] %vm974, %v859
  %989 = vst.msk [vmem:[%s3 + $0x38] sm:$0xf] %vm974, %v860
  %990 = vst.msk [vmem:[%s3 + $0x3c] sm:$0xf] %vm974, %v861
  %991 = vst.msk [vmem:[%s3 + $0x40] sm:$0xf] %vm974, %v862
  %992 = vst.msk [vmem:[%s3 + $0x44] sm:$0xf] %vm974, %v863
  %993 = vst.msk [vmem:[%s3 + $0x48] sm:$0xf] %vm974, %v864
  %994 = vst.msk [vmem:[%s3 + $0x4c] sm:$0xf] %vm974, %v865
  %995 = vst.msk [vmem:[%s3 + $0x50] sm:$0xf] %vm974, %v866
  %996 = vst.msk [vmem:[%s3 + $0x54] sm:$0xf] %vm974, %v867
  %997 = vst.msk [vmem:[%s3 + $0x58] sm:$0xf] %vm974, %v868
  %998 = vst.msk [vmem:[%s3 + $0x5c] sm:$0xf] %vm974, %v869
  %999 = vst.msk [vmem:[%s3 + $0x60] sm:$0xf] %vm974, %v870
  %1000 = vst.msk [vmem:[%s3 + $0x64] sm:$0xf] %vm974, %v871
  %1001 = vst.msk [vmem:[%s3 + $0x68] sm:$0xf] %vm974, %v872
  %1002 = vst.msk [vmem:[%s3 + $0x6c] sm:$0xf] %vm974, %v873
  %1003 = vst.msk [vmem:[%s3 + $0x70] sm:$0xf] %vm974, %v874
  %1004 = vst.msk [vmem:[%s3 + $0x74] sm:$0xf] %vm974, %v875
  %1005 = vst.msk [vmem:[%s3 + $0x78] sm:$0xf] %vm974, %v876
  %1006 = vst.msk [vmem:[%s3 + $0x7c] sm:$0xf] %vm974, %v877
  %1007 = vst.msk [vmem:[%s3 + $0x80] sm:$0xf] %vm974, %v878
  %1008 = vst.msk [vmem:[%s3 + $0x84] sm:$0xf] %vm974, %v879
  %1009 = vst.msk [vmem:[%s3 + $0x88] sm:$0xf] %vm974, %v880
  %1010 = vst.msk [vmem:[%s3 + $0x8c] sm:$0xf] %vm974, %v881
  %1011 = vst.msk [vmem:[%s3 + $0x90] sm:$0xf] %vm974, %v882
  %1012 = vst.msk [vmem:[%s3 + $0x94] sm:$0xf] %vm974, %v883
  %1013 = vst.msk [vmem:[%s3 + $0x98] sm:$0xf] %vm974, %v884
  %1014 = vst.msk [vmem:[%s3 + $0x9c] sm:$0xf] %vm974, %v885
  %1015 = vst.msk [vmem:[%s3 + $0xa0] sm:$0xf] %vm974, %v886
  %1016 = vst.msk [vmem:[%s3 + $0xa4] sm:$0xf] %vm974, %v887
  %1017 = vst.msk [vmem:[%s3 + $0xa8] sm:$0xf] %vm974, %v888
  %1018 = vst.msk [vmem:[%s3 + $0xac] sm:$0xf] %vm974, %v889
  %1019 = vst.msk [vmem:[%s3 + $0xb0] sm:$0xf] %vm974, %v890
  %1020 = vst.msk [vmem:[%s3 + $0xb4] sm:$0xf] %vm974, %v891
  %1021 = vst.msk [vmem:[%s3 + $0xb8] sm:$0xf] %vm974, %v892
  %1022 = vst.msk [vmem:[%s3 + $0xbc] sm:$0xf] %vm974, %v893
  %1023 = vst.msk [vmem:[%s3 + $0xc0] sm:$0xf] %vm974, %v894
  %1024 = vst.msk [vmem:[%s3 + $0xc4] sm:$0xf] %vm974, %v895
  %1025 = vst.msk [vmem:[%s3 + $0xc8] sm:$0xf] %vm974, %v896
  %1026 = vst.msk [vmem:[%s3 + $0xcc] sm:$0xf] %vm974, %v897
  %1027 = vst.msk [vmem:[%s3 + $0xd0] sm:$0xf] %vm974, %v898
  %1028 = vst.msk [vmem:[%s3 + $0xd4] sm:$0xf] %vm974, %v899
  %1029 = vst.msk [vmem:[%s3 + $0xd8] sm:$0xf] %vm974, %v900
  %1030 = vst.msk [vmem:[%s3 + $0xdc] sm:$0xf] %vm974, %v901
  %1031 = vst.msk [vmem:[%s3 + $0xe0] sm:$0xf] %vm974, %v902
  %1032 = vst.msk [vmem:[%s3 + $0xe4] sm:$0xf] %vm974, %v903
  %1033 = vst.msk [vmem:[%s3 + $0xe8] sm:$0xf] %vm974, %v904
  %1034 = vst.msk [vmem:[%s3 + $0xec] sm:$0xf] %vm974, %v905
  %1035 = vst.msk [vmem:[%s3 + $0xf0] sm:$0xf] %vm974, %v906
  %1036 = vst.msk [vmem:[%s3 + $0xf4] sm:$0xf] %vm974, %v907
  %1037 = vst.msk [vmem:[%s3 + $0xf8] sm:$0xf] %vm974, %v908
  %1038 = vst.msk [vmem:[%s3 + $0xfc] sm:$0xf] %vm974, %v909
  // Predicated region
  $region14: #{tpu_custom_call.1} parent=0 // pred_check
    _
  $region15: #{tpu_custom_call.1} parent=0 // pred_check_branch
    %1040 = sbr.rel (0) target = $region17
  $region16: #{tpu_custom_call.1} parent=0 // pred_region
    _
  $region17: #{tpu_custom_call.1} parent=0 // pred_fallthru
    _
  // Predicated region
  $region18: #{tpu_custom_call.1} parent=0 // pred_check
    _
  $region19: #{tpu_custom_call.1} parent=0 // pred_check_branch
    %1042 = sbr.rel (0) target = $region21
  $region20: #{tpu_custom_call.1} parent=0 // pred_region
    _
  $region21: #{tpu_custom_call.1} parent=0 // pred_fallthru
    _

</llo_original>
